<compile_context>
chip_gen: v7x
topology: tpu7x:2x2x1
jax: 0.10.0
libtpu: 0.0.40
codegen_flags: <defaults>
</compile_context>

<pallas_src>
import functools

import jax
import jax.numpy as jnp
import numpy as np
from jax import lax
from jax.experimental import pallas as pl
from jax.experimental.pallas import tpu as pltpu


def _round_up(x, m):
    return (x + m - 1) // m * m


# --------------------------------------------------------------------------- #
# Kernels
# --------------------------------------------------------------------------- #
def _skipgram_kernel_take(ids_ref, embed_ref, wT_ref, b_ref, out_ref, emb_ref):
    """Vectorized-gather variant.

    ids_ref  : (1, 1, TN) int32 VMEM  token ids of this token block
    embed_ref: (V, D)           VMEM  full embedding table (single-buffered)
    wT_ref   : (D, VN)          VMEM  fc weight slice (pre-transposed, bf16)
    b_ref    : (1, VN)   f32    VMEM  fc bias slice
    out_ref  : (TN, VN)         VMEM  output scores block
    emb_ref  : (TN, D)          VMEM  scratch: gathered embeddings (matmul dtype)
    """
    @pl.when(pl.program_id(1) == 0)          # gather once per token block
    def _gather():
        idx = jnp.clip(ids_ref[0, 0, :], 0, embed_ref.shape[0] - 1)
        rows = jnp.take(embed_ref[...], idx, axis=0, mode="clip")
        emb_ref[...] = rows.astype(emb_ref.dtype)

    scores = jnp.dot(emb_ref[...], wT_ref[...],
                     preferred_element_type=jnp.float32)
    out_ref[...] = (scores + b_ref[...]).astype(out_ref.dtype)


def _skipgram_kernel_loop(ids_smem, embed_ref, wT_ref, b_ref, out_ref, emb_ref):
    """Portable fallback: scalar-prefetched ids, unrolled per-row gather."""
    i = pl.program_id(0)
    j = pl.program_id(1)
    tn = emb_ref.shape[0]
    vmax = embed_ref.shape[0] - 1

    @pl.when(j == 0)                         # gather once per token block
    def _gather():
        base = pl.multiple_of(i * tn, 8)

        def body(t, carry):
            idx = jnp.clip(ids_smem[base + t], 0, vmax)
            emb_ref[pl.ds(t, 1), :] = embed_ref[pl.ds(idx, 1), :]
            return carry

        lax.fori_loop(0, tn, body, 0, unroll=min(8, tn))

    emb = emb_ref[...].astype(wT_ref.dtype)
    scores = jnp.dot(emb, wT_ref[...], preferred_element_type=jnp.float32)
    out_ref[...] = (scores + b_ref[...]).astype(out_ref.dtype)


# --------------------------------------------------------------------------- #
# Parameter prep (one-time, outside the hot path)
# --------------------------------------------------------------------------- #
def prepare_params(embed_table, fc_weight, fc_bias, *,
                   weight_dtype=jnp.bfloat16, table_dtype=jnp.float32):
    """Store fc weight transposed (D, V_pad) in bf16 and pad V to 128.

    The embedding table is kept f32 by default (dynamic single-row slices of
    a sublane-packed bf16 table are a fragile lowering); pass
    table_dtype=jnp.bfloat16 to halve its VMEM residency if desired.
    """
    V, D = embed_table.shape
    v_pad = _round_up(V, 128)
    wT = fc_weight.T.astype(weight_dtype)              # (D, V)
    b = fc_bias.astype(jnp.float32)
    if v_pad > V:
        wT = jnp.pad(wT, ((0, 0), (0, v_pad - V)))
        b = jnp.pad(b, (0, v_pad - V))
    return embed_table.astype(table_dtype), wT, b.reshape(1, -1)


# --------------------------------------------------------------------------- #
# Forward
# --------------------------------------------------------------------------- #
@functools.partial(
    jax.jit,
    static_argnames=("vocab_size", "gather_mode", "token_tile", "vocab_tile",
                     "out_dtype"))
def _skipgram_impl(ids, embed_table, fc_wT, fc_b2d, *, vocab_size, gather_mode,
                   token_tile, vocab_tile, out_dtype):
    B, S = ids.shape
    V_tab, D = embed_table.shape
    Dw, V_pad = fc_wT.shape
    assert Dw == D and fc_b2d.shape == (1, V_pad)
    N = B * S

    # Token tile: multiple of 8 (f32 sublane); prefer a divisor of N so the
    # padded out[:N] copy is avoided; keep >= 2 blocks so both TensorCores of
    # a v7x chip get work on the "parallel" axis.
    tn = _round_up(min(token_tile, _round_up(N, 8)), 8)
    if N % tn:
        for cand in range(tn, max(tn // 2, 8) - 1, -8):
            if N % cand == 0:
                tn = cand
                break
    if N > 8 and (N + tn - 1) // tn < 2:
        tn = _round_up((N + 1) // 2, 8)
    n_pad = _round_up(N, tn)
    n_blocks = n_pad // tn

    # Vocab tile: lane-dense multiple of 128 that divides the padded vocab.
    vn = min(_round_up(vocab_tile, 128), V_pad)
    while V_pad % vn:
        vn -= 128

    grid = (n_blocks, V_pad // vn)

    # Explicit VMEM budget: double-buffered tiles + table + scratch + slack.
    out_isz = np.dtype(out_dtype).itemsize
    vmem_bytes = (2 * V_tab * D * embed_table.dtype.itemsize   # table (<=2 bufs)
                  + 2 * D * vn * fc_wT.dtype.itemsize          # W^T tiles
                  + 2 * 8 * vn * 4                             # bias tiles
                  + 2 * tn * vn * out_isz                      # output tiles
                  + tn * D * 4                                 # emb scratch
                  + 2 * tn * 4)                                # ids tiles
    vmem_limit = int(min(max(vmem_bytes + (4 << 20), 32 << 20), 100 << 20))

    ids_flat = ids.reshape(-1).astype(jnp.int32)
    if n_pad > N:
        ids_flat = jnp.pad(ids_flat, (0, n_pad - N))           # pad with id 0

    if gather_mode == "take":
        ids3d = ids_flat.reshape(n_blocks, 1, tn)
        grid_spec = pltpu.PrefetchScalarGridSpec(
            num_scalar_prefetch=0,
            grid=grid,
            in_specs=[
                pl.BlockSpec((1, 1, tn), lambda i, j: (i, 0, 0)),
                # Constant index_map -> single-buffer the table.
                pl.BlockSpec((V_tab, D), lambda i, j: (0, 0),
                             pipeline_mode=pl.Buffered(1)),
                pl.BlockSpec((D, vn), lambda i, j: (0, j)),
                pl.BlockSpec((1, vn), lambda i, j: (0, j)),
            ],
            out_specs=pl.BlockSpec((tn, vn), lambda i, j: (i, j)),
            scratch_shapes=[pltpu.VMEM((tn, D), fc_wT.dtype)],
        )
        kernel = _skipgram_kernel_take
        args = (ids3d, embed_table, fc_wT, fc_b2d)
    else:
        grid_spec = pltpu.PrefetchScalarGridSpec(
            num_scalar_prefetch=1,                              # ids -> SMEM
            grid=grid,
            in_specs=[
                pl.BlockSpec((V_tab, D), lambda i, j, ids: (0, 0)),
                pl.BlockSpec((D, vn), lambda i, j, ids: (0, j)),
                pl.BlockSpec((1, vn), lambda i, j, ids: (0, j)),
            ],
            out_specs=pl.BlockSpec((tn, vn), lambda i, j, ids: (i, j)),
            scratch_shapes=[pltpu.VMEM((tn, D), embed_table.dtype)],
        )
        kernel = _skipgram_kernel_loop
        args = (ids_flat, embed_table, fc_wT, fc_b2d)

    out = pl.pallas_call(
        kernel,
        out_shape=jax.ShapeDtypeStruct((n_pad, V_pad), out_dtype),
        grid_spec=grid_spec,
        compiler_params=pltpu.CompilerParams(
            dimension_semantics=("parallel", "arbitrary"),
            vmem_limit_bytes=vmem_limit),
    )(*args)

    if n_pad > N or V_pad > vocab_size:
        out = out[:N, :vocab_size]
    return out.reshape(B, S, vocab_size)


_AUTO_GATHER_MODE = None


def skipgram_forward(ids, embed_table, fc_wT, fc_b2d, *, vocab_size,
                     gather_mode="auto", token_tile=256, vocab_tile=2048,
                     out_dtype=jnp.float32):
    """ids: (B, S) int.  Returns (B, S, vocab_size) scores.

    gather_mode: "take" (vectorized in-kernel gather), "loop" (scalar-prefetch
    per-row gather), or "auto" (try "take", fall back to "loop" if that gather
    does not lower on the installed jax version).
    """
    global _AUTO_GATHER_MODE
    kwargs = dict(vocab_size=vocab_size, token_tile=token_tile,
                  vocab_tile=vocab_tile, out_dtype=out_dtype)
    if gather_mode != "auto":
        return _skipgram_impl(ids, embed_table, fc_wT, fc_b2d,
                              gather_mode=gather_mode, **kwargs)
    if _AUTO_GATHER_MODE is None:
        try:
            out = _skipgram_impl(ids, embed_table, fc_wT, fc_b2d,
                                 gather_mode="take", **kwargs)
            jax.block_until_ready(out)
            _AUTO_GATHER_MODE = "take"
            return out
        except Exception:
            _AUTO_GATHER_MODE = "loop"
    return _skipgram_impl(ids, embed_table, fc_wT, fc_b2d,
                          gather_mode=_AUTO_GATHER_MODE, **kwargs)


# --------------------------------------------------------------------------- #
# Demo / correctness check
# --------------------------------------------------------------------------- #
if __name__ == "__main__":
    VOCAB = 256
    EMBED_DIM = 32
    BATCH, SEQ = 2, 8

    key = jax.random.PRNGKey(0)
    k_ids, k_emb, k_w, k_b = jax.random.split(key, 4)

    # torch: embed.weight.data.uniform_(0, vocab_size)
    embed_table = jax.random.uniform(
        k_emb, (VOCAB, EMBED_DIM), dtype=jnp.float32, minval=0.0,
        maxval=float(VOCAB))
    # torch Linear default init: U(-1/sqrt(fan_in), 1/sqrt(fan_in))
    bound = 1.0 / np.sqrt(EMBED_DIM)
    fc_weight = jax.random.uniform(
        k_w, (VOCAB, EMBED_DIM), dtype=jnp.float32, minval=-bound, maxval=bound)
    fc_bias = jax.random.uniform(
        k_b, (VOCAB,), dtype=jnp.float32, minval=-bound, maxval=bound)

    ids = jax.random.randint(k_ids, (BATCH, SEQ), 0, VOCAB, dtype=jnp.int32)

    # One-time param prep (transpose + bf16 weight + lane-dense vocab padding).
    tbl, wT, b2d = prepare_params(embed_table, fc_weight, fc_bias)

    # Reference with the *stored* parameter dtypes (exactly the math the
    # kernel performs: bf16 operands, f32 accumulation).
    emb_stored = tbl[ids].astype(wT.dtype).astype(jnp.float32)       # (B,S,D)
    w_stored = wT.astype(jnp.float32)[:, :VOCAB]                     # (D,V)
    ref_stored = jnp.dot(emb_stored, w_stored, precision="highest") + fc_bias

    scores, last_err = None, None
    # Prefer the vectorized gather; degrade gracefully to the scalar-prefetch
    # gather if its lowering is unavailable on this jax/Mosaic version.
    for mode in ("take", "loop"):
        try:
            out = skipgram_forward(ids, tbl, wT, b2d, vocab_size=VOCAB,
                                   gather_mode=mode)
            out = jax.block_until_ready(out)
            np.testing.assert_allclose(np.asarray(out), np.asarray(ref_stored),
                                       rtol=1e-4, atol=1e-2)
            scores = out
            break
        except Exception as e:
            last_err = e
    if scores is None:
        raise last_err

    assert scores.shape == (BATCH, SEQ, VOCAB)

    # Loose check against the original f32 module math (slack for the bf16
    # parameter storage).
    ref_f32 = jnp.dot(embed_table[ids], fc_weight.T,
                      precision="highest") + fc_bias
    np.testing.assert_allclose(np.asarray(scores), np.asarray(ref_f32),
                               rtol=5e-2, atol=6.0)

    print("KERNEL_OK")
</pallas_src>

<mosaic_0001>
module attributes {stable_mosaic.version = 11 : i64} {
  func.func @_skipgram_kernel_loop(%arg0: i32, %arg1: i32, %arg2: memref<16xi32, #tpu.memory_space<smem>>, %arg3: memref<256x32xf32, #tpu.memory_space<vmem>>, %arg4: memref<32x256xbf16, #tpu.memory_space<vmem>>, %arg5: memref<1x256xf32, #tpu.memory_space<vmem>>, %arg6: memref<8x256xf32, #tpu.memory_space<vmem>>, %arg7: memref<8x32xf32, #tpu.memory_space<vmem>>) attributes {dimension_semantics = [#tpu.dimension_semantics<parallel>, #tpu.dimension_semantics<arbitrary>], iteration_bounds = array<i64: 2, 1>, scalar_prefetch = 1 : i64, scratch_operands = 1 : i64, tpu.core_type = #tpu.core_type<tc>, window_params = [{pipeline_mode = #tpu.pipeline_mode<synchronous>, transform_indices = @transform_0, window_bounds = array<i64: 256, 32>}, {transform_indices = @transform_1, window_bounds = array<i64: 32, 256>}, {transform_indices = @transform_2, window_bounds = array<i64: 1, 256>}, {transform_indices = @transform_3, window_bounds = array<i64: 8, 256>}]} {
    %c0_i32 = arith.constant 0 : i32
    %0 = arith.cmpi eq, %arg1, %c0_i32 : i32
    %1 = arith.extui %0 : i1 to i32
    %c0_i32_0 = arith.constant 0 : i32
    %2 = arith.cmpi ne, %1, %c0_i32_0 : i32
    scf.if %2 {
      %c8_i32 = arith.constant 8 : i32
      %11 = arith.muli %arg0, %c8_i32 : i32
      %12 = tpu.assume_multiple %11, 8 : i32
      %c0_i32_8 = arith.constant 0 : i32
      %13 = arith.addi %12, %c0_i32_8 : i32
      %14 = arith.index_cast %13 : i32 to index
      %15 = memref.load %arg2[%14] : memref<16xi32, #tpu.memory_space<smem>>
      %c0_i32_9 = arith.constant 0 : i32
      %c255_i32 = arith.constant 255 : i32
      %16 = arith.maxsi %c0_i32_9, %15 : i32
      %17 = arith.minsi %c255_i32, %16 : i32
      %18 = arith.index_cast %17 : i32 to index
      %c0_10 = arith.constant 0 : index
      %19 = vector.load %arg3[%18, %c0_10] : memref<256x32xf32, #tpu.memory_space<vmem>>, vector<1x32xf32>
      %20 = arith.index_cast %c0_i32_8 : i32 to index
      %c0_11 = arith.constant 0 : index
      %21 = vector.load %arg7[%20, %c0_11] : memref<8x32xf32, #tpu.memory_space<vmem>>, vector<1x32xf32>
      tpu.vector_store %arg7[%20, %c0_11], %19 {strides = array<i32>} : memref<8x32xf32, #tpu.memory_space<vmem>>, vector<1x32xf32>,
      %c1_i32 = arith.constant 1 : i32
      %22 = arith.addi %12, %c1_i32 : i32
      %23 = arith.index_cast %22 : i32 to index
      %24 = memref.load %arg2[%23] : memref<16xi32, #tpu.memory_space<smem>>
      %c0_i32_12 = arith.constant 0 : i32
      %c255_i32_13 = arith.constant 255 : i32
      %25 = arith.maxsi %c0_i32_12, %24 : i32
      %26 = arith.minsi %c255_i32_13, %25 : i32
      %27 = arith.index_cast %26 : i32 to index
      %c0_14 = arith.constant 0 : index
      %28 = vector.load %arg3[%27, %c0_14] : memref<256x32xf32, #tpu.memory_space<vmem>>, vector<1x32xf32>
      %29 = arith.index_cast %c1_i32 : i32 to index
      %c0_15 = arith.constant 0 : index
      %30 = vector.load %arg7[%29, %c0_15] : memref<8x32xf32, #tpu.memory_space<vmem>>, vector<1x32xf32>
      tpu.vector_store %arg7[%29, %c0_15], %28 {strides = array<i32>} : memref<8x32xf32, #tpu.memory_space<vmem>>, vector<1x32xf32>,
      %c2_i32 = arith.constant 2 : i32
      %31 = arith.addi %12, %c2_i32 : i32
      %32 = arith.index_cast %31 : i32 to index
      %33 = memref.load %arg2[%32] : memref<16xi32, #tpu.memory_space<smem>>
      %c0_i32_16 = arith.constant 0 : i32
      %c255_i32_17 = arith.constant 255 : i32
      %34 = arith.maxsi %c0_i32_16, %33 : i32
      %35 = arith.minsi %c255_i32_17, %34 : i32
      %36 = arith.index_cast %35 : i32 to index
      %c0_18 = arith.constant 0 : index
      %37 = vector.load %arg3[%36, %c0_18] : memref<256x32xf32, #tpu.memory_space<vmem>>, vector<1x32xf32>
      %38 = arith.index_cast %c2_i32 : i32 to index
      %c0_19 = arith.constant 0 : index
      %39 = vector.load %arg7[%38, %c0_19] : memref<8x32xf32, #tpu.memory_space<vmem>>, vector<1x32xf32>
      tpu.vector_store %arg7[%38, %c0_19], %37 {strides = array<i32>} : memref<8x32xf32, #tpu.memory_space<vmem>>, vector<1x32xf32>,
      %c3_i32 = arith.constant 3 : i32
      %40 = arith.addi %12, %c3_i32 : i32
      %41 = arith.index_cast %40 : i32 to index
      %42 = memref.load %arg2[%41] : memref<16xi32, #tpu.memory_space<smem>>
      %c0_i32_20 = arith.constant 0 : i32
      %c255_i32_21 = arith.constant 255 : i32
      %43 = arith.maxsi %c0_i32_20, %42 : i32
      %44 = arith.minsi %c255_i32_21, %43 : i32
      %45 = arith.index_cast %44 : i32 to index
      %c0_22 = arith.constant 0 : index
      %46 = vector.load %arg3[%45, %c0_22] : memref<256x32xf32, #tpu.memory_space<vmem>>, vector<1x32xf32>
      %47 = arith.index_cast %c3_i32 : i32 to index
      %c0_23 = arith.constant 0 : index
      %48 = vector.load %arg7[%47, %c0_23] : memref<8x32xf32, #tpu.memory_space<vmem>>, vector<1x32xf32>
      tpu.vector_store %arg7[%47, %c0_23], %46 {strides = array<i32>} : memref<8x32xf32, #tpu.memory_space<vmem>>, vector<1x32xf32>,
      %c4_i32 = arith.constant 4 : i32
      %49 = arith.addi %12, %c4_i32 : i32
      %50 = arith.index_cast %49 : i32 to index
      %51 = memref.load %arg2[%50] : memref<16xi32, #tpu.memory_space<smem>>
      %c0_i32_24 = arith.constant 0 : i32
      %c255_i32_25 = arith.constant 255 : i32
      %52 = arith.maxsi %c0_i32_24, %51 : i32
      %53 = arith.minsi %c255_i32_25, %52 : i32
      %54 = arith.index_cast %53 : i32 to index
      %c0_26 = arith.constant 0 : index
      %55 = vector.load %arg3[%54, %c0_26] : memref<256x32xf32, #tpu.memory_space<vmem>>, vector<1x32xf32>
      %56 = arith.index_cast %c4_i32 : i32 to index
      %c0_27 = arith.constant 0 : index
      %57 = vector.load %arg7[%56, %c0_27] : memref<8x32xf32, #tpu.memory_space<vmem>>, vector<1x32xf32>
      tpu.vector_store %arg7[%56, %c0_27], %55 {strides = array<i32>} : memref<8x32xf32, #tpu.memory_space<vmem>>, vector<1x32xf32>,
      %c5_i32 = arith.constant 5 : i32
      %58 = arith.addi %12, %c5_i32 : i32
      %59 = arith.index_cast %58 : i32 to index
      %60 = memref.load %arg2[%59] : memref<16xi32, #tpu.memory_space<smem>>
      %c0_i32_28 = arith.constant 0 : i32
      %c255_i32_29 = arith.constant 255 : i32
      %61 = arith.maxsi %c0_i32_28, %60 : i32
      %62 = arith.minsi %c255_i32_29, %61 : i32
      %63 = arith.index_cast %62 : i32 to index
      %c0_30 = arith.constant 0 : index
      %64 = vector.load %arg3[%63, %c0_30] : memref<256x32xf32, #tpu.memory_space<vmem>>, vector<1x32xf32>
      %65 = arith.index_cast %c5_i32 : i32 to index
      %c0_31 = arith.constant 0 : index
      %66 = vector.load %arg7[%65, %c0_31] : memref<8x32xf32, #tpu.memory_space<vmem>>, vector<1x32xf32>
      tpu.vector_store %arg7[%65, %c0_31], %64 {strides = array<i32>} : memref<8x32xf32, #tpu.memory_space<vmem>>, vector<1x32xf32>,
      %c6_i32 = arith.constant 6 : i32
      %67 = arith.addi %12, %c6_i32 : i32
      %68 = arith.index_cast %67 : i32 to index
      %69 = memref.load %arg2[%68] : memref<16xi32, #tpu.memory_space<smem>>
      %c0_i32_32 = arith.constant 0 : i32
      %c255_i32_33 = arith.constant 255 : i32
      %70 = arith.maxsi %c0_i32_32, %69 : i32
      %71 = arith.minsi %c255_i32_33, %70 : i32
      %72 = arith.index_cast %71 : i32 to index
      %c0_34 = arith.constant 0 : index
      %73 = vector.load %arg3[%72, %c0_34] : memref<256x32xf32, #tpu.memory_space<vmem>>, vector<1x32xf32>
      %74 = arith.index_cast %c6_i32 : i32 to index
      %c0_35 = arith.constant 0 : index
      %75 = vector.load %arg7[%74, %c0_35] : memref<8x32xf32, #tpu.memory_space<vmem>>, vector<1x32xf32>
      tpu.vector_store %arg7[%74, %c0_35], %73 {strides = array<i32>} : memref<8x32xf32, #tpu.memory_space<vmem>>, vector<1x32xf32>,
      %c7_i32 = arith.constant 7 : i32
      %76 = arith.addi %12, %c7_i32 : i32
      %77 = arith.index_cast %76 : i32 to index
      %78 = memref.load %arg2[%77] : memref<16xi32, #tpu.memory_space<smem>>
      %c0_i32_36 = arith.constant 0 : i32
      %c255_i32_37 = arith.constant 255 : i32
      %79 = arith.maxsi %c0_i32_36, %78 : i32
      %80 = arith.minsi %c255_i32_37, %79 : i32
      %81 = arith.index_cast %80 : i32 to index
      %c0_38 = arith.constant 0 : index
      %82 = vector.load %arg3[%81, %c0_38] : memref<256x32xf32, #tpu.memory_space<vmem>>, vector<1x32xf32>
      %83 = arith.index_cast %c7_i32 : i32 to index
      %c0_39 = arith.constant 0 : index
      %84 = vector.load %arg7[%83, %c0_39] : memref<8x32xf32, #tpu.memory_space<vmem>>, vector<1x32xf32>
      tpu.vector_store %arg7[%83, %c0_39], %82 {strides = array<i32>} : memref<8x32xf32, #tpu.memory_space<vmem>>, vector<1x32xf32>,
      %c8_i32_40 = arith.constant 8 : i32
    } else {
    }
    %c0 = arith.constant 0 : index
    %c0_1 = arith.constant 0 : index
    %3 = vector.load %arg7[%c0, %c0_1] : memref<8x32xf32, #tpu.memory_space<vmem>>, vector<8x32xf32>
    %4 = arith.truncf %3 : vector<8x32xf32> to vector<8x32xbf16>
    %c0_2 = arith.constant 0 : index
    %c0_3 = arith.constant 0 : index
    %5 = vector.load %arg4[%c0_2, %c0_3] : memref<32x256xbf16, #tpu.memory_space<vmem>>, vector<32x256xbf16>
    %cst = arith.constant dense<0.000000e+00> : vector<8x256xf32>
    %6 = tpu.matmul %4, %5, %cst {dimension_numbers = #tpu.dot_dimension_numbers<[1], [0], [0], [1], [0, 0, 1, 1], [], []>} : vector<8x32xbf16>, vector<32x256xbf16>, vector<8x256xf32> -> vector<8x256xf32>
    %c0_4 = arith.constant 0 : index
    %c0_5 = arith.constant 0 : index
    %7 = vector.load %arg5[%c0_4, %c0_5] : memref<1x256xf32, #tpu.memory_space<vmem>>, vector<1x256xf32>
    %8 = vector.broadcast %7 : vector<1x256xf32> to vector<8x256xf32>
    %9 = arith.addf %6, %8 : vector<8x256xf32>
    %c0_6 = arith.constant 0 : index
    %c0_7 = arith.constant 0 : index
    %10 = vector.load %arg6[%c0_6, %c0_7] : memref<8x256xf32, #tpu.memory_space<vmem>>, vector<8x256xf32>
    tpu.vector_store %arg6[%c0_6, %c0_7], %9 {strides = array<i32>} : memref<8x256xf32, #tpu.memory_space<vmem>>, vector<8x256xf32>,
    return
  }
  func.func @transform_0(%arg0: i32, %arg1: i32, %arg2: memref<16xi32, #tpu.memory_space<smem>>) -> (i32, i32) {
    %c0_i32 = arith.constant 0 : i32
    %c0_i32_0 = arith.constant 0 : i32
    %c0_i32_1 = arith.constant 0 : i32
    return %c0_i32, %c0_i32_0 : i32, i32
  }
  func.func @transform_1(%arg0: i32, %arg1: i32, %arg2: memref<16xi32, #tpu.memory_space<smem>>) -> (i32, i32) {
    %c0_i32 = arith.constant 0 : i32
    %c0_i32_0 = arith.constant 0 : i32
    return %c0_i32, %arg1 : i32, i32
  }
  func.func @transform_2(%arg0: i32, %arg1: i32, %arg2: memref<16xi32, #tpu.memory_space<smem>>) -> (i32, i32) {
    %c0_i32 = arith.constant 0 : i32
    %c0_i32_0 = arith.constant 0 : i32
    return %c0_i32, %arg1 : i32, i32
  }
  func.func @transform_3(%arg0: i32, %arg1: i32, %arg2: memref<16xi32, #tpu.memory_space<smem>>) -> (i32, i32) {
    %c0_i32 = arith.constant 0 : i32
    return %arg0, %arg1 : i32, i32
  }
}

</mosaic_0001>

<llo_original>
// kernel: _skipgram_impl.1
$region0: #{_skipgram_impl.1}
  #allocation0 [shape = 'u32[]', space=smem, size = 0x4, offset = 0x4, fixed_abs, tag = 'smem constant byte address 0x4 - core index']
  #allocation1 [shape = 'u32[144,128]{1,0:T(1,128)}', space=vmem, size = 0x12000, scoped, tag = 'internal scratch']
  #allocation2 [shape = 'f32[8,32]{1,0:T(8,128)}', space=vmem, size = 0x1000, scoped, tag = 'scratch operand']
  #allocation3 [shape = 's32[1]{0}', space=sflag, size = 0x4, scoped, tag = 'scoped memory for _skipgram_impl.1']
  #allocation4 [shape = 'u8[512]{0}', space=smem, size = 0x200, scoped, tag = 'prefetched SMEM operand 0']
  %s0 = inlined_call_operand.vmem [shape: s32[16], index: 0, kind: input, shape index: {}]
  %s1 = inlined_call_operand.vmem [shape: f32[256,32], index: 1, kind: input, shape index: {}]
  %s2 = inlined_call_operand.vmem [shape: bf16[32,256], index: 2, kind: input, shape index: {}]
  %s3 = inlined_call_operand.vmem [shape: f32[1,256], index: 3, kind: input, shape index: {}]
  %s4 = inlined_call_operand.hbm [shape: f32[16,256], index: 4, kind: output, shape index: {}]
  %s5 = sld [smem:[#allocation0]]
  $region49: #{_skipgram_impl.1} parent=0
    _
  %s7 = ssub.s32 1, %s5
  %s8 = scalar_select 0, %s7, %s5
  %s9 = sshll.u32 %s0, 4
  %s10 = int_to_ptr.vmem [resolvable:$true] %s9
  %12 = dma.vmem_to_smem %s10, 16, [#allocation4], [#allocation3]
  %13 = dma.done [#allocation3], 16
  %14 = sfence
  $region1: #{_skipgram_impl.1} parent=0
    #allocation5 [shape = 'u8[16384]{0}', space=vmem, size = 0x4000, scoped, tag = 'output window, operand 0']
    #allocation6 [shape = 's32[2]{0}', space=sflag, size = 0x8, scoped, tag = 'scoped memory for _skipgram_impl.1']
    %15 = vsyncpa [#allocation6], 0
    %s16 = scalar_lea.sflag [#allocation6], 1
    %17 = vsyncpa %s16, 0
    loop: start=0, step=1, limit=4
    $region2: #{_skipgram_impl.1} parent=1 // loop_pre_header
      _
    $region3: #{_skipgram_impl.1} parent=1 // loop_header
      %s19 = sphi 0, %s23
      %p20 = scmp.ge.s32.totalorder %s19, 4
      %s26 = sphi 0, %s38
      %s27 = sphi 0, %s34
      %s28 = sphi 0, %s26
      %s29 = sphi 0, %s27
      %s30 = sphi 0, %s28
      %s31 = sphi 0, %s29
      %s39 = sphi 0, %s39
      %s41 = sphi 0, %s39
      %s42 = sphi 0, %s41
      %s56 = sphi 0, %s42
      %s62 = sphi 0, %s64
      %s65 = sphi 0, %s62
      %s66 = sphi 0, %s65
      %s82 = sphi 0, %s66
      %s88 = sphi 0, %s90
      %s91 = sphi 0, %s88
      %s92 = sphi 0, %s91
      %s108 = sphi 0, %s92
      %s116 = sphi 0, %s118
      %s119 = sphi 0, %s116
      %s120 = sphi 0, %s119
      %s136 = sphi 0, %s120
    $region4: #{_skipgram_impl.1} parent=1 // loop_header_branch
      %22 = sbr.rel (%p20) target = $region8
    $region5: #{_skipgram_impl.1} parent=1 // loop_body
      %s24 = ssub.s32 %s19, 1
      %s25 = ssub.s32 %s19, 2
      %s32 = sadd.s32 1, %s27
      %p33 = scmp.ge.s32.totalorder %s32, 1
      %s34 = scalar_select %p33, 0, %s32
      %s35 = sadd.s32 1, %s26
      %s36 = scalar_select %p33, %s35, %s26
      %p37 = scmp.ge.s32.totalorder %s36, 2
      %s38 = scalar_select %p37, 0, %s36
      %s40 = sadd.s32 %s39, 1
      %p43 = scmp.eq.s32.totalorder %s19, 1
      %p44 = scmp.ne.s32.totalorder %s39, %s41
      %p45 = scmp.eq.s32.totalorder %s19, 0
      %p46 = por %p44, %p45
      %p47 = scmp.ne.s32.totalorder %s39, %s41
      %p48 = scmp.eq.s32.totalorder %s24, 1
      %p49 = por %p47, %p48
      %p50 = scmp.ne.s32.totalorder %s41, %s42
      %p51 = scmp.eq.s32.totalorder %s24, 0
      %p52 = por %p50, %p51
      %p53 = scmp.ne.s32.totalorder %s41, %s42
      %p54 = scmp.eq.s32.totalorder %s25, 1
      %p55 = por %p53, %p54
      %p57 = scmp.ne.s32.totalorder %s42, %s56
      %p58 = scmp.eq.s32.totalorder %s25, 0
      %p59 = por %p57, %p58
      %s60 = ssub.s32 %s27, %s34
      %p61 = scmp.eq.s32.totalorder %s60, 0
      %s63 = sadd.s32 %s62, 1
      %s64 = scalar_select %p61, %s62, %s63
      %p67 = pneg %p61
      %p68 = scmp.eq.s32.totalorder %s19, 1
      %p69 = por %p67, %p68
      %p70 = scmp.ne.s32.totalorder %s62, %s65
      %p71 = scmp.eq.s32.totalorder %s19, 0
      %p72 = por %p70, %p71
      %p73 = scmp.ne.s32.totalorder %s62, %s65
      %p74 = scmp.eq.s32.totalorder %s24, 1
      %p75 = por %p73, %p74
      %p76 = scmp.ne.s32.totalorder %s65, %s66
      %p77 = scmp.eq.s32.totalorder %s24, 0
      %p78 = por %p76, %p77
      %p79 = scmp.ne.s32.totalorder %s65, %s66
      %p80 = scmp.eq.s32.totalorder %s25, 1
      %p81 = por %p79, %p80
      %p83 = scmp.ne.s32.totalorder %s66, %s82
      %p84 = scmp.eq.s32.totalorder %s25, 0
      %p85 = por %p83, %p84
      %s86 = ssub.s32 %s27, %s34
      %p87 = scmp.eq.s32.totalorder %s86, 0
      %s89 = sadd.s32 %s88, 1
      %s90 = scalar_select %p87, %s88, %s89
      %p93 = pneg %p87
      %p94 = scmp.eq.s32.totalorder %s19, 1
      %p95 = por %p93, %p94
      %p96 = scmp.ne.s32.totalorder %s88, %s91
      %p97 = scmp.eq.s32.totalorder %s19, 0
      %p98 = por %p96, %p97
      %p99 = scmp.ne.s32.totalorder %s88, %s91
      %p100 = scmp.eq.s32.totalorder %s24, 1
      %p101 = por %p99, %p100
      %p102 = scmp.ne.s32.totalorder %s91, %s92
      %p103 = scmp.eq.s32.totalorder %s24, 0
      %p104 = por %p102, %p103
      %p105 = scmp.ne.s32.totalorder %s91, %s92
      %p106 = scmp.eq.s32.totalorder %s25, 1
      %p107 = por %p105, %p106
      %p109 = scmp.ne.s32.totalorder %s92, %s108
      %p110 = scmp.eq.s32.totalorder %s25, 0
      %p111 = por %p109, %p110
      %s112 = ssub.s32 %s26, %s38
      %s113 = ssub.s32 %s27, %s34
      %s114 = sor.u32 %s112, %s113
      %p115 = scmp.eq.s32.totalorder %s114, 0
      %s117 = sadd.s32 %s116, 1
      %s118 = scalar_select %p115, %s116, %s117
      %p121 = pneg %p115
      %p122 = scmp.eq.s32.totalorder %s19, 1
      %p123 = por %p121, %p122
      %p124 = scmp.ne.s32.totalorder %s116, %s119
      %p125 = scmp.eq.s32.totalorder %s19, 0
      %p126 = por %p124, %p125
      %p127 = scmp.ne.s32.totalorder %s116, %s119
      %p128 = scmp.eq.s32.totalorder %s24, 1
      %p129 = por %p127, %p128
      %p130 = scmp.ne.s32.totalorder %s119, %s120
      %p131 = scmp.eq.s32.totalorder %s24, 0
      %p132 = por %p130, %p131
      %p133 = scmp.ne.s32.totalorder %s119, %s120
      %p134 = scmp.eq.s32.totalorder %s25, 1
      %p135 = por %p133, %p134
      %p137 = scmp.ne.s32.totalorder %s120, %s136
      %p138 = scmp.eq.s32.totalorder %s25, 0
      %p139 = por %p137, %p138
      %p140 = scmp.le.s32.totalorder 1, %s19
      %p141 = scmp.lt.s32.totalorder %s19, 3
      %p142 = pnand %p140, %p141
      %p143 = pneg %p142
      // Predicated region
      $region9: #{_skipgram_impl.1} parent=5 // pred_check
        _
      $region10: #{_skipgram_impl.1} parent=5 // pred_check_branch
        %145 = sbr.rel (%p142) target = $region12
      $region11: #{_skipgram_impl.1} parent=5 // pred_region
        %s146 = ssub.s32 %s19, 1
        // Predicated region
        $region13: #{_skipgram_impl.1} parent=11 // pred_check
          %p147 = pneg %p52
        $region14: #{_skipgram_impl.1} parent=11 // pred_check_branch
          %149 = sbr.rel (%p147) target = $region16
        $region15: #{_skipgram_impl.1} parent=11 // pred_region
          _
        $region16: #{_skipgram_impl.1} parent=11 // pred_fallthru
          _
        // Predicated region
        $region17: #{_skipgram_impl.1} parent=11 // pred_check
          %p150 = pneg %p78
        $region18: #{_skipgram_impl.1} parent=11 // pred_check_branch
          %152 = sbr.rel (%p150) target = $region20
        $region19: #{_skipgram_impl.1} parent=11 // pred_region
          %s153 = smul.u32 2, %s29
          %p154 = scmp.lt.s32.totalorder %s153, 1
          %s155 = scalar_select %p154, %s153, 1
          %s156 = smul.addr %s155, 4
          %s157 = scalar_lea.vmem %s2, %s156
          %s158 = smul.u32 2, %s29
        $region20: #{_skipgram_impl.1} parent=11 // pred_fallthru
          _
        // Predicated region
        $region21: #{_skipgram_impl.1} parent=11 // pred_check
          %p159 = pneg %p104
        $region22: #{_skipgram_impl.1} parent=11 // pred_check_branch
          %161 = sbr.rel (%p159) target = $region24
        $region23: #{_skipgram_impl.1} parent=11 // pred_region
          %s162 = smul.u32 2, %s29
          %p163 = scmp.lt.s32.totalorder %s162, 1
          %s164 = scalar_select %p163, %s162, 1
          %s165 = scalar_lea.vmem %s3, %s164
          %s166 = smul.u32 2, %s29
        $region24: #{_skipgram_impl.1} parent=11 // pred_fallthru
          _
      $region12: #{_skipgram_impl.1} parent=5 // pred_fallthru
        _
      %p167 = scmp.lt.s32.totalorder %s19, 2
      // Predicated region
      $region25: #{_skipgram_impl.1} parent=5 // pred_check
        %p168 = pneg %p167
      $region26: #{_skipgram_impl.1} parent=5 // pred_check_branch
        %170 = sbr.rel (%p168) target = $region28
      $region27: #{_skipgram_impl.1} parent=5 // pred_region
        _
      $region28: #{_skipgram_impl.1} parent=5 // pred_fallthru
        _
      %p171 = scmp.le.s32.totalorder 1, %s19
      %p172 = scmp.lt.s32.totalorder %s19, 3
      %p173 = pnand %p171, %p172
      %p174 = pneg %p173
      // Predicated region
      $region29: #{_skipgram_impl.1} parent=5 // pred_check
        _
      $region30: #{_skipgram_impl.1} parent=5 // pred_check_branch
        %176 = sbr.rel (%p173) target = $region32
      $region31: #{_skipgram_impl.1} parent=5 // pred_region
        %s177 = ssub.s32 %s19, 1
        %p178 = pneg %p52
        %p179 = pneg %p49
        %s180 = smul.u32 2, %s29
        %p181 = scmp.lt.s32.totalorder %s180, 1
        %s182 = scalar_select %p181, %s180, 1
        %s183 = smul.addr %s182, 4
        %s184 = scalar_lea.vmem %s2, %s183
        %p185 = pneg %p78
        %p186 = pneg %p75
        %s187 = smul.u32 2, %s29
        %p188 = scmp.lt.s32.totalorder %s187, 1
        %s189 = scalar_select %p188, %s187, 1
        %s190 = scalar_lea.vmem %s3, %s189
        %p191 = pneg %p104
        %p192 = pneg %p101
        %p193 = pneg %p132
        %p194 = pneg %p129
        %s195 = sand.u32 %s119, 1
        %s196 = scalar_lea.sflag [#allocation6], %s195
        %s197 = sand.u32 %s119, 1
        %s198 = smul.addr %s197, 16
        %s199 = scalar_lea.vmem [#allocation5], %s198
        %s200 = smul.u32 2, %s29
        %p201 = scmp.lt.s32.totalorder %s200, 1
        %s202 = scalar_select %p201, %s200, 1
        %s203 = smul.addr %s202, 4
        %s204 = scalar_lea.vmem %s2, %s203
        %s205 = smul.u32 2, %s29
        %s206 = smul.u32 2, %s29
        %p207 = scmp.lt.s32.totalorder %s206, 1
        %s208 = scalar_select %p207, %s206, 1
        %s209 = scalar_lea.vmem %s3, %s208
        %s210 = smul.u32 2, %s29
        %s211 = smul.u32 2, %s29
        %p213 = scmp.eq.s32.totalorder %s29, 0
        // Predicated region
        $region33: #{_skipgram_impl.1} parent=31 // pred_check
          %p214 = pneg %p213
        $region34: #{_skipgram_impl.1} parent=31 // pred_check_branch
          %216 = sbr.rel (%p214) target = $region36
        $region35: #{_skipgram_impl.1} parent=31 // pred_region
          %s217 = smul.u32 %s28, 8
          %s218 = sld [smem:[#allocation4 + %s217]]
          %p219 = scmp.gt.s32.totalorder %s218, 0
          %s220 = scalar_select %p219, %s218, 0
          %p221 = scmp.lt.s32.totalorder %s220, 255
          %s222 = scalar_select %p221, %s220, 255
          %s223 = scalar_lea.vmem %s1, %s222
          %v224 = vld [vmem:[%s223] sm:$0x1]
          %vm225 = vcmask 253952
          %226 = vst.msk [vmem:[#allocation2] sm:$0x1] %vm225, %v224
          %s227 = sadd.s32 %s217, 1
          %s228 = sld [smem:[#allocation4 + %s227]]
          %p229 = scmp.gt.s32.totalorder %s228, 0
          %s230 = scalar_select %p229, %s228, 0
          %p231 = scmp.lt.s32.totalorder %s230, 255
          %s232 = scalar_select %p231, %s230, 255
          %s233 = scalar_lea.vmem %s1, %s232
          %v234 = vld [vmem:[%s233] sm:$0x1]
          %235 = vst.msk [vmem:[#allocation2 + $0x1] sm:$0x1] %vm225, %v234
          %s236 = sadd.s32 %s217, 2
          %s237 = sld [smem:[#allocation4 + %s236]]
          %p238 = scmp.gt.s32.totalorder %s237, 0
          %s239 = scalar_select %p238, %s237, 0
          %p240 = scmp.lt.s32.totalorder %s239, 255
          %s241 = scalar_select %p240, %s239, 255
          %s242 = scalar_lea.vmem %s1, %s241
          %v243 = vld [vmem:[%s242] sm:$0x1]
          %244 = vst.msk [vmem:[#allocation2 + $0x2] sm:$0x1] %vm225, %v243
          %s245 = sadd.s32 %s217, 3
          %s246 = sld [smem:[#allocation4 + %s245]]
          %p247 = scmp.gt.s32.totalorder %s246, 0
          %s248 = scalar_select %p247, %s246, 0
          %p249 = scmp.lt.s32.totalorder %s248, 255
          %s250 = scalar_select %p249, %s248, 255
          %s251 = scalar_lea.vmem %s1, %s250
          %v252 = vld [vmem:[%s251] sm:$0x1]
          %253 = vst.msk [vmem:[#allocation2 + $0x3] sm:$0x1] %vm225, %v252
          %s254 = sadd.s32 %s217, 4
          %s255 = sld [smem:[#allocation4 + %s254]]
          %p256 = scmp.gt.s32.totalorder %s255, 0
          %s257 = scalar_select %p256, %s255, 0
          %p258 = scmp.lt.s32.totalorder %s257, 255
          %s259 = scalar_select %p258, %s257, 255
          %s260 = scalar_lea.vmem %s1, %s259
          %v261 = vld [vmem:[%s260] sm:$0x1]
          %262 = vst.msk [vmem:[#allocation2 + $0x4] sm:$0x1] %vm225, %v261
          %s263 = sadd.s32 %s217, 5
          %s264 = sld [smem:[#allocation4 + %s263]]
          %p265 = scmp.gt.s32.totalorder %s264, 0
          %s266 = scalar_select %p265, %s264, 0
          %p267 = scmp.lt.s32.totalorder %s266, 255
          %s268 = scalar_select %p267, %s266, 255
          %s269 = scalar_lea.vmem %s1, %s268
          %v270 = vld [vmem:[%s269] sm:$0x1]
          %271 = vst.msk [vmem:[#allocation2 + $0x5] sm:$0x1] %vm225, %v270
          %s272 = sadd.s32 %s217, 6
          %s273 = sld [smem:[#allocation4 + %s272]]
          %p274 = scmp.gt.s32.totalorder %s273, 0
          %s275 = scalar_select %p274, %s273, 0
          %p276 = scmp.lt.s32.totalorder %s275, 255
          %s277 = scalar_select %p276, %s275, 255
          %s278 = scalar_lea.vmem %s1, %s277
          %v279 = vld [vmem:[%s278] sm:$0x1]
          %280 = vst.msk [vmem:[#allocation2 + $0x6] sm:$0x1] %vm225, %v279
          %s281 = sadd.s32 %s217, 7
          %s282 = sld [smem:[#allocation4 + %s281]]
          %p283 = scmp.gt.s32.totalorder %s282, 0
          %s284 = scalar_select %p283, %s282, 0
          %p285 = scmp.lt.s32.totalorder %s284, 255
          %s286 = scalar_select %p285, %s284, 255
          %s287 = scalar_lea.vmem %s1, %s286
          %v288 = vld [vmem:[%s287] sm:$0x1]
          %289 = vst.msk [vmem:[#allocation2 + $0x7] sm:$0x1] %vm225, %v288
        $region36: #{_skipgram_impl.1} parent=31 // pred_fallthru
          _
        %v290 = vld [vmem:[#allocation2] sm:$0xff]
        %v291 = vpack.c.bf16 %v290, %v290
        %v292 = vld [vmem:[%s204] sm:$0xff]
        %v293 = vld [vmem:[%s204 + $0x8] sm:$0xff]
        %v294 = vld [vmem:[%s204 + $0x10] sm:$0xff]
        %v295 = vld [vmem:[%s204 + $0x18] sm:$0xff]
        %v296 = vld [vmem:[%s209] sm:$0x3]
        %v298 = vlaneseq
        %v299 = vshrl.u32 %v298, 7
        %v300 = vsub.s32 0, %v299
        %v301 = vrot.slane %v296, %v300
        %v302 = vlaneseq
        %v303 = vshrl.u32 %v302, 7
        %v304 = vsub.s32 1, %v303
        %v305 = vrot.slane %v296, %v304
        %v312 = vunpack.c.l.b16 %v292
        %v313 = vunpack.c.h.b16 %v292
        %v314 = vunpack.c.l.b16 %v293
        %v315 = vunpack.c.h.b16 %v293
        %v316 = vunpack.c.l.b16 %v294
        %v317 = vunpack.c.h.b16 %v294
        %v318 = vunpack.c.l.b16 %v295
        %v319 = vunpack.c.h.b16 %v295
        %v320 = vpack.c.b16 %v314, %v312
        %v321 = vpack.c.b16 %v315, %v313
        %v322 = vpack.c.b16 %v318, %v316
        %v323 = vpack.c.b16 %v319, %v317
        %vm328 = vcmask 261120
        %v330 = vsel %vm328, %v291, 0
        %332 = vmatprep.subr.bf16.mxu0 %v321
        %333 = vmatpush1.bf16.msra.mxu0 %v320
        %334 = vmatprep.subr.bf16.mxu0 %v323
        %335 = vmatpush1.bf16.msra.mxu0 %v322
        %336 = vmatprep.subr.bf16.mxu0 0
        %337 = vmatpush1.bf16.msra.mxu0 0
        %338 = vmatprep.subr.bf16.mxu0 0
        %339 = vmatpush1.bf16.msra.mxu0 0
        %340 = vmatprep.subr.bf16.mxu0 0
        %341 = vmatpush1.bf16.msra.mxu0 0
        %342 = vmatprep.subr.bf16.mxu0 0
        %343 = vmatpush1.bf16.msra.mxu0 0
        %344 = vmatprep.subr.bf16.mxu0 0
        %345 = vmatpush1.bf16.msra.mxu0 0
        %346 = vmatprep.subr.bf16.mxu0 0
        %347 = vmatpush1.bf16.msra.mxu0 0
        %348 = vmatprep.subr.bf16.mxu0 0
        %349 = vmatpush1.bf16.msra.mxu0 0
        %350 = vmatprep.subr.bf16.mxu0 0
        %351 = vmatpush1.bf16.msra.mxu0 0
        %352 = vmatprep.subr.bf16.mxu0 0
        %353 = vmatpush1.bf16.msra.mxu0 0
        %354 = vmatprep.subr.bf16.mxu0 0
        %355 = vmatpush1.bf16.msra.mxu0 0
        %356 = vmatprep.subr.bf16.mxu0 0
        %357 = vmatpush1.bf16.msra.mxu0 0
        %358 = vmatprep.subr.bf16.mxu0 0
        %359 = vmatpush1.bf16.msra.mxu0 0
        %360 = vmatprep.subr.bf16.mxu0 0
        %361 = vmatpush1.bf16.msra.mxu0 0
        %362 = vmatprep.subr.bf16.mxu0 0
        %363 = vmatpush1.bf16.msra.mxu0 0
        %364 = vmatprep.mubr.bf16.mxu0 0
        %365 = vmatmul.mubr.bf16.gmra.mrb[0].mxu0 %v330
        %v366 = vpop.f32.mrb[0].mxu0
        %v367 = vadd.f32 %v301, %v366
        %v368 = vpop.f32.mrb[0].mxu0
        %v369 = vadd.f32 %v305, %v368
        %v370 = vpop.f32.mrb[0].mxu0
        %v371 = vpop.f32.mrb[0].mxu0
        %372 = vdwg.mxu0
        %373 = vst [vmem:[%s199] sm:$0xff] %v367
        %374 = vst [vmem:[%s199 + $0x8] sm:$0xff] %v369
        %s375 = sand.u32 %s119, 1
        %s376 = scalar_lea.sflag [#allocation6], %s375
        %s377 = sand.u32 %s119, 1
        %s378 = smul.addr %s377, 16
        %s379 = scalar_lea.vmem [#allocation5], %s378
        // Predicated region
        $region37: #{_skipgram_impl.1} parent=31 // pred_check
          %p380 = pneg %p129
        $region38: #{_skipgram_impl.1} parent=31 // pred_check_branch
          %382 = sbr.rel (%p380) target = $region40
        $region39: #{_skipgram_impl.1} parent=31 // pred_region
          %s383 = smul.u32 2, %s29
          %s385 = ssub.s32 256, 256
          %386 = vsyncadd %s376, %s385
          %s387 = smul.addr %s28, 2
          %s388 = sadd.s32 %s383, %s387
          %s389 = smul.addr %s388, 128
          %s390 = scalar_lea.hbm %s4, %s389
          %s392 = sshll.u32 %s379, 4
          %s393 = int_to_ptr.vmem [resolvable:$true] %s392
          %395 = dma.vmem_to_hbm [thread:$0]  %s393, 256, %s390, %s376
        $region40: #{_skipgram_impl.1} parent=31 // pred_fallthru
          _
      $region32: #{_skipgram_impl.1} parent=5 // pred_fallthru
        _
      %p396 = scmp.le.s32.totalorder 2, %s19
      // Predicated region
      $region41: #{_skipgram_impl.1} parent=5 // pred_check
        %p397 = pneg %p396
      $region42: #{_skipgram_impl.1} parent=5 // pred_check_branch
        %399 = sbr.rel (%p397) target = $region44
      $region43: #{_skipgram_impl.1} parent=5 // pred_region
        %s400 = ssub.s32 %s19, 2
        // Predicated region
        $region45: #{_skipgram_impl.1} parent=43 // pred_check
          %p401 = pneg %p135
        $region46: #{_skipgram_impl.1} parent=43 // pred_check_branch
          %403 = sbr.rel (%p401) target = $region48
        $region47: #{_skipgram_impl.1} parent=43 // pred_region
          %s404 = sand.u32 %s120, 1
          %s405 = scalar_lea.sflag [#allocation6], %s404
          %s406 = sand.u32 %s120, 1
          %s407 = smul.addr %s406, 16
          %s408 = scalar_lea.vmem [#allocation5], %s407
          %409 = dma.done %s405, 256
        $region48: #{_skipgram_impl.1} parent=43 // pred_fallthru
          _
      $region44: #{_skipgram_impl.1} parent=5 // pred_fallthru
        _
    $region6: #{_skipgram_impl.1} parent=1 // loop_footer
      %s23 = sadd.s32 1, %s19
    $region7: #{_skipgram_impl.1} parent=1 // loop_footer_branch
      %18 = sbr.rel target = $region3
    $region8: #{_skipgram_impl.1} parent=1 // loop_exit
      _
    %410 = vsyncpa [#allocation6], 1
    %s411 = scalar_lea.sflag [#allocation6], 1
    %412 = vsyncpa %s411, 1

</llo_original>
